<compile_context>
chip_gen: v5e
topology: v5e:2x2
jax: 0.10.0
libtpu: 0.0.40
codegen_flags: <defaults>
</compile_context>

<pallas_src>
import math

import jax
import jax.numpy as jnp
from jax.experimental import pallas as pl
from jax.experimental.pallas import tpu as pltpu


def _round_up(x, m):
    return ((x + m - 1) // m) * m


def _vmem_limit(nbytes):
    # Explicit scoped-VMEM cap: actual buffer footprint + 50% headroom,
    # floored at 8 MiB (Mosaic internals) and capped at v7x's 64 MiB physical.
    return int(min(64 << 20, max(8 << 20, 1.5 * nbytes)))


# ----------------------------------------------------------------------------
# Kernel 1: fused QKV projection, tiled over rows of the node-embedding table.
# One MXU matmul per row tile; outputs Q (width d) and K|V (lane-dense 2d).
# ----------------------------------------------------------------------------
def qkv_proj_kernel(x_ref, w_ref, q_ref, kv_ref):
    d = q_ref.shape[1]
    qkv = jnp.dot(x_ref[...], w_ref[...],
                  preferred_element_type=jnp.float32)      # (TM, 3d) f32
    q_ref[...] = qkv[:, :d].astype(q_ref.dtype)
    kv_ref[...] = qkv[:, d:].astype(kv_ref.dtype)


# ----------------------------------------------------------------------------
# Kernel 2: masked per-head attention, 2-D grid (row tile i, key tile j).
# Accumulates unnormalized numerator / per-head denominator in f32 scratch;
# normalizes + stores only on the last key step.
# ----------------------------------------------------------------------------
def make_attn_kernel(head_num: int, head_dim: int):
    d = head_num * head_dim
    nt_dims = (((1,), (1,)), ((), ()))       # q @ k^T, contract last dims

    def kernel(a_ref, q_ref, kv_ref, o_ref, num_ref, den_ref):
        j = pl.program_id(1)

        @pl.when(j == 0)
        def _init():
            num_ref[...] = jnp.zeros_like(num_ref)
            den_ref[...] = jnp.zeros_like(den_ref)

        a = a_ref[...].astype(jnp.float32)    # (TM, TK) {0,1}, f32 elementwise
        q = q_ref[...]                        # (TM, d)  bf16
        kv = kv_ref[...]                      # (TK, 2d) bf16  (K | V)

        num_parts, den_parts = [], []
        for h in range(head_num):             # static unroll (head_num small)
            lo = h * head_dim
            q_h = q[:, lo:lo + head_dim]
            k_h = kv[:, lo:lo + head_dim]
            v_h = kv[:, d + lo:d + lo + head_dim]
            s = jax.lax.dot_general(q_h, k_h, nt_dims,
                                    preferred_element_type=jnp.float32)  # (TM,TK)
            e = a * jnp.exp(jnp.clip(s, -10.0, 10.0))                    # f32
            # deferred normalization: accumulate e@V and rowsum(e) only
            num_parts.append(jnp.dot(e, v_h.astype(jnp.float32),
                                     preferred_element_type=jnp.float32))
            den_parts.append(jnp.sum(e, axis=1, keepdims=True))

        num_ref[...] += jnp.concatenate(num_parts, axis=1)   # (TM, d)
        den_ref[...] += jnp.concatenate(den_parts, axis=1)   # (TM, H)

        @pl.when(j == pl.num_programs(1) - 1)
        def _finalize():
            num = num_ref[...]
            den = den_ref[...]
            outs = []
            for h in range(head_num):
                lo = h * head_dim
                inv = 1.0 / (den[:, h:h + 1] + 1e-8)     # exact, only (TM,1)
                outs.append(num[:, lo:lo + head_dim] * inv)
            # single lane-dense full-width store of the row tile
            o_ref[...] = jnp.concatenate(outs, axis=1).astype(o_ref.dtype)

    return kernel


# ----------------------------------------------------------------------------
# Wrapper: dense adjacency scatter, padding, two pallas_calls.
# ----------------------------------------------------------------------------
def gt_layer_forward(rows, cols, embeds, wq, wk, wv, *, n_nodes, head_num,
                     row_tile=256, key_tile=512):
    f32, bf16 = jnp.float32, jnp.bfloat16
    d = embeds.shape[1]
    assert d % head_num == 0
    head_dim = d // head_num

    # Clamp tiles for small graphs (keep 128-lane alignment), pad N so both
    # tile sizes divide it.
    n_min = _round_up(n_nodes, 128)
    row_tile = min(row_tile, n_min)
    key_tile = min(key_tile, n_min)
    n_pad = _round_up(n_nodes, math.lcm(row_tile, key_tile))
    n_row_tiles = n_pad // row_tile
    n_key_tiles = n_pad // key_tile

    # Dense {0,1} mask (bf16: exact for 0/1, halves the dominant HBM stream).
    A = jnp.zeros((n_pad, n_pad), bf16).at[rows, cols].set(1.0)
    x = jnp.zeros((n_pad, d), bf16).at[:n_nodes, :].set(embeds.astype(bf16))
    wqkv = jnp.concatenate([wq, wk, wv], axis=1).astype(bf16)   # (d, 3d)

    # ---- kernel 1: fused QKV projection -------------------------------------
    x_spec = pl.BlockSpec((row_tile, d), lambda i: (i, 0))
    w_spec = pl.BlockSpec((d, 3 * d), lambda i: (0, 0))
    qo_spec = pl.BlockSpec((row_tile, d), lambda i: (i, 0))
    kvo_spec = pl.BlockSpec((row_tile, 2 * d), lambda i: (i, 0))

    proj_bytes = 2 * (row_tile * d + d * 3 * d + row_tile * d
                      + row_tile * 2 * d) * 2                  # bf16 buffers x2
    q, kv = pl.pallas_call(
        qkv_proj_kernel,
        grid=(n_row_tiles,),
        in_specs=[x_spec, w_spec],
        out_specs=[qo_spec, kvo_spec],
        out_shape=[jax.ShapeDtypeStruct((n_pad, d), bf16),
                   jax.ShapeDtypeStruct((n_pad, 2 * d), bf16)],
        compiler_params=pltpu.CompilerParams(
            dimension_semantics=("parallel",),
            vmem_limit_bytes=_vmem_limit(proj_bytes)),
    )(x, wqkv)

    # ---- kernel 2: masked attention, key-axis tiled --------------------------
    a_spec = pl.BlockSpec((row_tile, key_tile), lambda i, j: (i, j))
    qa_spec = pl.BlockSpec((row_tile, d), lambda i, j: (i, 0))
    kva_spec = pl.BlockSpec((key_tile, 2 * d), lambda i, j: (j, 0))
    o_spec = pl.BlockSpec((row_tile, d), lambda i, j: (i, 0))

    attn_bytes = (2 * row_tile * key_tile * 2       # A tiles (bf16, x2 bufs)
                  + 2 * row_tile * d * 2            # q row block
                  + 2 * key_tile * 2 * d * 2        # K|V key block
                  + 2 * row_tile * d * 4            # output block (f32)
                  + row_tile * d * 4                # numerator scratch
                  + row_tile * 128 * 4)             # denom scratch (lane-padded)

    out = pl.pallas_call(
        make_attn_kernel(head_num, head_dim),
        grid=(n_row_tiles, n_key_tiles),            # reduction axis last
        in_specs=[a_spec, qa_spec, kva_spec],
        out_specs=o_spec,
        out_shape=jax.ShapeDtypeStruct((n_pad, d), f32),
        scratch_shapes=[pltpu.VMEM((row_tile, d), jnp.float32),
                        pltpu.VMEM((row_tile, head_num), jnp.float32)],
        compiler_params=pltpu.CompilerParams(
            dimension_semantics=("parallel", "arbitrary"),
            vmem_limit_bytes=_vmem_limit(attn_bytes)),
    )(A, q, kv)

    return out[:n_nodes, :]


# ----------------------------------------------------------------------------
# Pure-JAX reference (direct transcription of the torch forward, all f32).
# ----------------------------------------------------------------------------
def gt_layer_ref(rows, cols, embeds, wq, wk, wv, *, n_nodes, head_num):
    d = embeds.shape[1]
    head_dim = d // head_num
    row_e = embeds[rows]
    col_e = embeds[cols]
    q = (row_e @ wq).reshape(-1, head_num, head_dim)
    k = (col_e @ wk).reshape(-1, head_num, head_dim)
    v = (col_e @ wv).reshape(-1, head_num, head_dim)
    att = jnp.einsum('ehd,ehd->eh', q, k)
    att = jnp.clip(att, -10.0, 10.0)
    exp_att = jnp.exp(att)
    att_norm = jnp.zeros((n_nodes, head_num), embeds.dtype).at[rows].add(exp_att)[rows]
    att = exp_att / (att_norm + 1e-8)
    res = (att[:, :, None] * v).reshape(-1, d)
    return jnp.zeros((n_nodes, d), embeds.dtype).at[rows].add(res)


# ----------------------------------------------------------------------------
if __name__ == "__main__":
    n_nodes = 200          # users + items
    emb_size = 64
    head_num = 4
    n_edges_raw = 600

    key = jax.random.PRNGKey(0)
    k_emb, k_wq, k_wk, k_wv, k_r, k_c = jax.random.split(key, 6)

    embeds = jax.random.normal(k_emb, (n_nodes, emb_size), jnp.float32) * 0.1
    limit = (6.0 / (emb_size + emb_size)) ** 0.5            # xavier_uniform
    wq = jax.random.uniform(k_wq, (emb_size, emb_size), jnp.float32, -limit, limit)
    wk = jax.random.uniform(k_wk, (emb_size, emb_size), jnp.float32, -limit, limit)
    wv = jax.random.uniform(k_wv, (emb_size, emb_size), jnp.float32, -limit, limit)

    # deterministic coalesced COO edge list
    r0 = jax.random.randint(k_r, (n_edges_raw,), 0, n_nodes)
    c0 = jax.random.randint(k_c, (n_edges_raw,), 0, n_nodes)
    h = jnp.unique(r0 * n_nodes + c0)
    rows = (h // n_nodes).astype(jnp.int32)
    cols = (h % n_nodes).astype(jnp.int32)

    out = gt_layer_forward(rows, cols, embeds, wq, wk, wv,
                           n_nodes=n_nodes, head_num=head_num)
    out = jax.block_until_ready(out)

    ref = gt_layer_ref(rows, cols, embeds, wq, wk, wv,
                       n_nodes=n_nodes, head_num=head_num)
    assert out.shape == (n_nodes, emb_size)
    # Tolerance accounts for bf16 rounding of A/Q/K/V matmul operands
    # (accumulation and elementwise math stay f32).
    max_err = float(jnp.max(jnp.abs(out - ref)))
    assert max_err < 3e-3, f"max abs error {max_err}"
    print("KERNEL_OK")
</pallas_src>

<mosaic_0001>
module attributes {stable_mosaic.version = 11 : i64} {
  func.func @qkv_proj_kernel(%arg0: i32, %arg1: memref<256x64xbf16, #tpu.memory_space<vmem>>, %arg2: memref<64x192xbf16, #tpu.memory_space<vmem>>, %arg3: memref<256x64xbf16, #tpu.memory_space<vmem>>, %arg4: memref<256x128xbf16, #tpu.memory_space<vmem>>) attributes {dimension_semantics = [#tpu.dimension_semantics<parallel>], iteration_bounds = array<i64: 1>, scalar_prefetch = 0 : i64, scratch_operands = 0 : i64, tpu.core_type = #tpu.core_type<tc>, window_params = [{transform_indices = @transform_0, window_bounds = array<i64: 256, 64>}, {pipeline_mode = #tpu.pipeline_mode<synchronous>, transform_indices = @transform_1, window_bounds = array<i64: 64, 192>}, {transform_indices = @transform_2, window_bounds = array<i64: 256, 64>}, {transform_indices = @transform_3, window_bounds = array<i64: 256, 128>}]} {
    %c0 = arith.constant 0 : index
    %c0_0 = arith.constant 0 : index
    %0 = vector.load %arg1[%c0, %c0_0] : memref<256x64xbf16, #tpu.memory_space<vmem>>, vector<256x64xbf16>
    %c0_1 = arith.constant 0 : index
    %c0_2 = arith.constant 0 : index
    %1 = vector.load %arg2[%c0_1, %c0_2] : memref<64x192xbf16, #tpu.memory_space<vmem>>, vector<64x192xbf16>
    %cst = arith.constant dense<0.000000e+00> : vector<256x192xf32>
    %2 = tpu.matmul %0, %1, %cst {dimension_numbers = #tpu.dot_dimension_numbers<[1], [0], [0], [1], [0, 0, 1, 1], [], []>} : vector<256x64xbf16>, vector<64x192xbf16>, vector<256x192xf32> -> vector<256x192xf32>
    %3 = vector.extract_strided_slice %2 {offsets = [0, 0], sizes = [256, 64], strides = [1, 1]} : vector<256x192xf32> to vector<256x64xf32>
    %4 = arith.truncf %3 : vector<256x64xf32> to vector<256x64xbf16>
    %c0_3 = arith.constant 0 : index
    %c0_4 = arith.constant 0 : index
    %5 = vector.load %arg3[%c0_3, %c0_4] : memref<256x64xbf16, #tpu.memory_space<vmem>>, vector<256x64xbf16>
    tpu.vector_store %arg3[%c0_3, %c0_4], %4 {strides = array<i32>} : memref<256x64xbf16, #tpu.memory_space<vmem>>, vector<256x64xbf16>,
    %6 = vector.extract_strided_slice %2 {offsets = [0, 64], sizes = [256, 128], strides = [1, 1]} : vector<256x192xf32> to vector<256x128xf32>
    %7 = arith.truncf %6 : vector<256x128xf32> to vector<256x128xbf16>
    %c0_5 = arith.constant 0 : index
    %c0_6 = arith.constant 0 : index
    %8 = vector.load %arg4[%c0_5, %c0_6] : memref<256x128xbf16, #tpu.memory_space<vmem>>, vector<256x128xbf16>
    tpu.vector_store %arg4[%c0_5, %c0_6], %7 {strides = array<i32>} : memref<256x128xbf16, #tpu.memory_space<vmem>>, vector<256x128xbf16>,
    return
  }
  func.func @transform_0(%arg0: i32) -> (i32, i32) {
    %c0_i32 = arith.constant 0 : i32
    %c0_i32_0 = arith.constant 0 : i32
    return %arg0, %c0_i32 : i32, i32
  }
  func.func @transform_1(%arg0: i32) -> (i32, i32) {
    %c0_i32 = arith.constant 0 : i32
    %c0_i32_0 = arith.constant 0 : i32
    %c0_i32_1 = arith.constant 0 : i32
    return %c0_i32, %c0_i32_0 : i32, i32
  }
  func.func @transform_2(%arg0: i32) -> (i32, i32) {
    %c0_i32 = arith.constant 0 : i32
    %c0_i32_0 = arith.constant 0 : i32
    return %arg0, %c0_i32 : i32, i32
  }
  func.func @transform_3(%arg0: i32) -> (i32, i32) {
    %c0_i32 = arith.constant 0 : i32
    %c0_i32_0 = arith.constant 0 : i32
    return %arg0, %c0_i32 : i32, i32
  }
}

</mosaic_0001>

<llo_original>
// kernel: tpu_custom_call.1
$region0: #{tpu_custom_call.1}
  #allocation0 [shape = 'u32[]', space=smem, size = 0x4, offset = 0x4, fixed_abs, tag = 'smem constant byte address 0x4 - core index']
  #allocation1 [shape = 'u32[72,128]{1,0:T(1,128)}', space=vmem, size = 0x9000, scoped, tag = 'internal scratch']
  %s0 = inlined_call_operand.vmem [shape: bf16[256,64], index: 0, kind: input, shape index: {}]
  %s1 = inlined_call_operand.vmem [shape: bf16[64,192], index: 1, kind: input, shape index: {}]
  %s2 = inlined_call_operand.vmem [shape: bf16[256,64], index: 2, kind: output, shape index: {0}]
  %s3 = inlined_call_operand.hbm [shape: bf16[256,128], index: 3, kind: output, shape index: {1}]
  %4 = xla_tuple %s2, %s3
  %s5 = sld [smem:[#allocation0]]
  $region26: #{tpu_custom_call.1} parent=0
    _
  %s7 = ssub.s32 1, %s5
  %s8 = scalar_select 0, %s7, %s5
  $region1: #{tpu_custom_call.1} parent=0
    #allocation2 [shape = 'u8[65536]{0}', space=vmem, size = 0x10000, scoped, tag = 'output window, operand 1, single buffered']
    #allocation3 [shape = 's32[1]{0}', space=sflag, size = 0x4, scoped, tag = 'scoped memory for tpu_custom_call.1']
    %9 = vsyncpa [#allocation3], 0
    // Predicated region
    $region2: #{tpu_custom_call.1} parent=1 // pred_check
      _
    $region3: #{tpu_custom_call.1} parent=1 // pred_check_branch
      %11 = sbr.rel (0) target = $region5
    $region4: #{tpu_custom_call.1} parent=1 // pred_region
      _
    $region5: #{tpu_custom_call.1} parent=1 // pred_fallthru
      _
    // Predicated region
    $region6: #{tpu_custom_call.1} parent=1 // pred_check
      _
    $region7: #{tpu_custom_call.1} parent=1 // pred_check_branch
      %13 = sbr.rel (0) target = $region9
    $region8: #{tpu_custom_call.1} parent=1 // pred_region
      _
    $region9: #{tpu_custom_call.1} parent=1 // pred_fallthru
      _
    %v15 = vld [vmem:[%s0] sm:$0xf]
    %v16 = vld [vmem:[%s0 + $0x4] sm:$0xf]
    %v17 = vld [vmem:[%s0 + $0x8] sm:$0xf]
    %v18 = vld [vmem:[%s0 + $0xc] sm:$0xf]
    %v19 = vld [vmem:[%s0 + $0x10] sm:$0xf]
    %v20 = vld [vmem:[%s0 + $0x14] sm:$0xf]
    %v21 = vld [vmem:[%s0 + $0x18] sm:$0xf]
    %v22 = vld [vmem:[%s0 + $0x1c] sm:$0xf]
    %v23 = vld [vmem:[%s0 + $0x20] sm:$0xf]
    %v24 = vld [vmem:[%s0 + $0x24] sm:$0xf]
    %v25 = vld [vmem:[%s0 + $0x28] sm:$0xf]
    %v26 = vld [vmem:[%s0 + $0x2c] sm:$0xf]
    %v27 = vld [vmem:[%s0 + $0x30] sm:$0xf]
    %v28 = vld [vmem:[%s0 + $0x34] sm:$0xf]
    %v29 = vld [vmem:[%s0 + $0x38] sm:$0xf]
    %v30 = vld [vmem:[%s0 + $0x3c] sm:$0xf]
    %v31 = vld [vmem:[%s0 + $0x40] sm:$0xf]
    %v32 = vld [vmem:[%s0 + $0x44] sm:$0xf]
    %v33 = vld [vmem:[%s0 + $0x48] sm:$0xf]
    %v34 = vld [vmem:[%s0 + $0x4c] sm:$0xf]
    %v35 = vld [vmem:[%s0 + $0x50] sm:$0xf]
    %v36 = vld [vmem:[%s0 + $0x54] sm:$0xf]
    %v37 = vld [vmem:[%s0 + $0x58] sm:$0xf]
    %v38 = vld [vmem:[%s0 + $0x5c] sm:$0xf]
    %v39 = vld [vmem:[%s0 + $0x60] sm:$0xf]
    %v40 = vld [vmem:[%s0 + $0x64] sm:$0xf]
    %v41 = vld [vmem:[%s0 + $0x68] sm:$0xf]
    %v42 = vld [vmem:[%s0 + $0x6c] sm:$0xf]
    %v43 = vld [vmem:[%s0 + $0x70] sm:$0xf]
    %v44 = vld [vmem:[%s0 + $0x74] sm:$0xf]
    %v45 = vld [vmem:[%s0 + $0x78] sm:$0xf]
    %v46 = vld [vmem:[%s0 + $0x7c] sm:$0xf]
    %v47 = vld [vmem:[%s1] sm:$0xff]
    %v48 = vld [vmem:[%s1 + $0x8] sm:$0xff]
    %v49 = vld [vmem:[%s1 + $0x10] sm:$0xff]
    %v50 = vld [vmem:[%s1 + $0x18] sm:$0xff]
    %v51 = vld [vmem:[%s1 + $0x20] sm:$0xff]
    %v52 = vld [vmem:[%s1 + $0x28] sm:$0xff]
    %v53 = vld [vmem:[%s1 + $0x30] sm:$0xff]
    %v54 = vld [vmem:[%s1 + $0x38] sm:$0xff]
    %v87 = vunpack.c.l.b16 %v15
    %v88 = vunpack.c.l.b16 %v16
    %v89 = vunpack.c.l.b16 %v17
    %v90 = vunpack.c.l.b16 %v18
    %v91 = vunpack.c.l.b16 %v19
    %v92 = vunpack.c.l.b16 %v20
    %v93 = vunpack.c.l.b16 %v21
    %v94 = vunpack.c.l.b16 %v22
    %v95 = vunpack.c.l.b16 %v23
    %v96 = vunpack.c.l.b16 %v24
    %v97 = vunpack.c.l.b16 %v25
    %v98 = vunpack.c.l.b16 %v26
    %v99 = vunpack.c.l.b16 %v27
    %v100 = vunpack.c.l.b16 %v28
    %v101 = vunpack.c.l.b16 %v29
    %v102 = vunpack.c.l.b16 %v30
    %v103 = vunpack.c.l.b16 %v31
    %v104 = vunpack.c.l.b16 %v32
    %v105 = vunpack.c.l.b16 %v33
    %v106 = vunpack.c.l.b16 %v34
    %v107 = vunpack.c.l.b16 %v35
    %v108 = vunpack.c.l.b16 %v36
    %v109 = vunpack.c.l.b16 %v37
    %v110 = vunpack.c.l.b16 %v38
    %v111 = vunpack.c.l.b16 %v39
    %v112 = vunpack.c.l.b16 %v40
    %v113 = vunpack.c.l.b16 %v41
    %v114 = vunpack.c.l.b16 %v42
    %v115 = vunpack.c.l.b16 %v43
    %v116 = vunpack.c.l.b16 %v44
    %v117 = vunpack.c.l.b16 %v45
    %v118 = vunpack.c.l.b16 %v46
    %v119 = vpack.c.b16 %v88, %v87
    %v120 = vpack.c.b16 %v90, %v89
    %v121 = vpack.c.b16 %v92, %v91
    %v122 = vpack.c.b16 %v94, %v93
    %v123 = vpack.c.b16 %v96, %v95
    %v124 = vpack.c.b16 %v98, %v97
    %v125 = vpack.c.b16 %v100, %v99
    %v126 = vpack.c.b16 %v102, %v101
    %v127 = vpack.c.b16 %v104, %v103
    %v128 = vpack.c.b16 %v106, %v105
    %v129 = vpack.c.b16 %v108, %v107
    %v130 = vpack.c.b16 %v110, %v109
    %v131 = vpack.c.b16 %v112, %v111
    %v132 = vpack.c.b16 %v114, %v113
    %v133 = vpack.c.b16 %v116, %v115
    %v134 = vpack.c.b16 %v118, %v117
    %v143 = vunpack.c.l.b16 %v47
    %v144 = vunpack.c.h.b16 %v47
    %v145 = vunpack.c.l.b16 %v48
    %v146 = vunpack.c.h.b16 %v48
    %v147 = vunpack.c.l.b16 %v49
    %v148 = vunpack.c.h.b16 %v49
    %v149 = vunpack.c.l.b16 %v50
    %v150 = vunpack.c.h.b16 %v50
    %v151 = vunpack.c.l.b16 %v51
    %v152 = vunpack.c.h.b16 %v51
    %v153 = vunpack.c.l.b16 %v52
    %v154 = vunpack.c.h.b16 %v52
    %v155 = vunpack.c.l.b16 %v53
    %v156 = vunpack.c.h.b16 %v53
    %v157 = vunpack.c.l.b16 %v54
    %v158 = vunpack.c.h.b16 %v54
    %v159 = vpack.c.b16 %v145, %v143
    %v160 = vpack.c.b16 %v146, %v144
    %v161 = vpack.c.b16 %v149, %v147
    %v162 = vpack.c.b16 %v150, %v148
    %v163 = vpack.c.b16 %v153, %v151
    %v164 = vpack.c.b16 %v154, %v152
    %v165 = vpack.c.b16 %v157, %v155
    %v166 = vpack.c.b16 %v158, %v156
    %vm175 = vcmask 523264
    %v177 = vsel %vm175, %v119, 0
    %v180 = vsel %vm175, %v120, 0
    %v183 = vsel %vm175, %v121, 0
    %v186 = vsel %vm175, %v122, 0
    %v189 = vsel %vm175, %v123, 0
    %v192 = vsel %vm175, %v124, 0
    %v195 = vsel %vm175, %v125, 0
    %v198 = vsel %vm175, %v126, 0
    %v201 = vsel %vm175, %v127, 0
    %v204 = vsel %vm175, %v128, 0
    %v207 = vsel %vm175, %v129, 0
    %v210 = vsel %vm175, %v130, 0
    %v213 = vsel %vm175, %v131, 0
    %v216 = vsel %vm175, %v132, 0
    %v219 = vsel %vm175, %v133, 0
    %v222 = vsel %vm175, %v134, 0
    %224 = vmatpush.bf16.msra.mxu0 0
    %225 = vmatpush.bf16.msra.mxu0 0
    %226 = vmatpush.bf16.msra.mxu0 0
    %227 = vmatpush.bf16.msra.mxu0 0
    %228 = vmatpush.bf16.msra.mxu0 %v165
    %229 = vmatpush.bf16.msra.mxu0 %v163
    %230 = vmatpush.bf16.msra.mxu0 %v161
    %231 = vmatpush.bf16.msra.mxu0 %v159
    %232 = vmatmul.bf16.gmra.mxu0 %v177
    %v233 = vpop.f32.mrf.mxu0
    %v234 = vadd.f32 0.0, %v233
    %v235 = vpop.f32.mrf.mxu0
    %v236 = vadd.f32 0.0, %v235
    %237 = vmatmul.bf16.gmra.mxu0 %v180
    %v238 = vpop.f32.mrf.mxu0
    %v239 = vadd.f32 0.0, %v238
    %v240 = vpop.f32.mrf.mxu0
    %v241 = vadd.f32 0.0, %v240
    %242 = vmatmul.bf16.gmra.mxu0 %v183
    %v243 = vpop.f32.mrf.mxu0
    %v244 = vadd.f32 0.0, %v243
    %v245 = vpop.f32.mrf.mxu0
    %v246 = vadd.f32 0.0, %v245
    %247 = vmatmul.bf16.gmra.mxu0 %v186
    %v248 = vpop.f32.mrf.mxu0
    %v249 = vadd.f32 0.0, %v248
    %v250 = vpop.f32.mrf.mxu0
    %v251 = vadd.f32 0.0, %v250
    %252 = vmatmul.bf16.gmra.mxu0 %v189
    %v253 = vpop.f32.mrf.mxu0
    %v254 = vadd.f32 0.0, %v253
    %v255 = vpop.f32.mrf.mxu0
    %v256 = vadd.f32 0.0, %v255
    %257 = vmatmul.bf16.gmra.mxu0 %v192
    %v258 = vpop.f32.mrf.mxu0
    %v259 = vadd.f32 0.0, %v258
    %v260 = vpop.f32.mrf.mxu0
    %v261 = vadd.f32 0.0, %v260
    %262 = vmatmul.bf16.gmra.mxu0 %v195
    %v263 = vpop.f32.mrf.mxu0
    %v264 = vadd.f32 0.0, %v263
    %v265 = vpop.f32.mrf.mxu0
    %v266 = vadd.f32 0.0, %v265
    %267 = vmatmul.bf16.gmra.mxu0 %v198
    %v268 = vpop.f32.mrf.mxu0
    %v269 = vadd.f32 0.0, %v268
    %v270 = vpop.f32.mrf.mxu0
    %v271 = vadd.f32 0.0, %v270
    %272 = vmatmul.bf16.gmra.mxu0 %v201
    %v273 = vpop.f32.mrf.mxu0
    %v274 = vadd.f32 0.0, %v273
    %v275 = vpop.f32.mrf.mxu0
    %v276 = vadd.f32 0.0, %v275
    %277 = vmatmul.bf16.gmra.mxu0 %v204
    %v278 = vpop.f32.mrf.mxu0
    %v279 = vadd.f32 0.0, %v278
    %v280 = vpop.f32.mrf.mxu0
    %v281 = vadd.f32 0.0, %v280
    %282 = vmatmul.bf16.gmra.mxu0 %v207
    %v283 = vpop.f32.mrf.mxu0
    %v284 = vadd.f32 0.0, %v283
    %v285 = vpop.f32.mrf.mxu0
    %v286 = vadd.f32 0.0, %v285
    %287 = vmatmul.bf16.gmra.mxu0 %v210
    %v288 = vpop.f32.mrf.mxu0
    %v289 = vadd.f32 0.0, %v288
    %v290 = vpop.f32.mrf.mxu0
    %v291 = vadd.f32 0.0, %v290
    %292 = vmatmul.bf16.gmra.mxu0 %v213
    %v293 = vpop.f32.mrf.mxu0
    %v294 = vadd.f32 0.0, %v293
    %v295 = vpop.f32.mrf.mxu0
    %v296 = vadd.f32 0.0, %v295
    %297 = vmatmul.bf16.gmra.mxu0 %v216
    %v298 = vpop.f32.mrf.mxu0
    %v299 = vadd.f32 0.0, %v298
    %v300 = vpop.f32.mrf.mxu0
    %v301 = vadd.f32 0.0, %v300
    %302 = vmatmul.bf16.gmra.mxu0 %v219
    %v303 = vpop.f32.mrf.mxu0
    %v304 = vadd.f32 0.0, %v303
    %v305 = vpop.f32.mrf.mxu0
    %v306 = vadd.f32 0.0, %v305
    %307 = vmatmul.bf16.gmra.mxu0 %v222
    %v308 = vpop.f32.mrf.mxu0
    %v309 = vadd.f32 0.0, %v308
    %v310 = vpop.f32.mrf.mxu0
    %v311 = vadd.f32 0.0, %v310
    %312 = vdwg.mxu0
    %313 = vmatpush.bf16.msra.mxu0 0
    %314 = vmatpush.bf16.msra.mxu0 0
    %315 = vmatpush.bf16.msra.mxu0 0
    %316 = vmatpush.bf16.msra.mxu0 0
    %317 = vmatpush.bf16.msra.mxu0 %v166
    %318 = vmatpush.bf16.msra.mxu0 %v164
    %319 = vmatpush.bf16.msra.mxu0 %v162
    %320 = vmatpush.bf16.msra.mxu0 %v160
    %321 = vmatmul.bf16.gmra.mxu0 %v177
    %v322 = vpop.f32.mrf.mxu0
    %v323 = vadd.f32 0.0, %v322
    %v324 = vpop.f32.mrf.mxu0
    %v325 = vadd.f32 0.0, %v324
    %326 = vmatmul.bf16.gmra.mxu0 %v180
    %v327 = vpop.f32.mrf.mxu0
    %v328 = vadd.f32 0.0, %v327
    %v329 = vpop.f32.mrf.mxu0
    %v330 = vadd.f32 0.0, %v329
    %331 = vmatmul.bf16.gmra.mxu0 %v183
    %v332 = vpop.f32.mrf.mxu0
    %v333 = vadd.f32 0.0, %v332
    %v334 = vpop.f32.mrf.mxu0
    %v335 = vadd.f32 0.0, %v334
    %336 = vmatmul.bf16.gmra.mxu0 %v186
    %v337 = vpop.f32.mrf.mxu0
    %v338 = vadd.f32 0.0, %v337
    %v339 = vpop.f32.mrf.mxu0
    %v340 = vadd.f32 0.0, %v339
    %341 = vmatmul.bf16.gmra.mxu0 %v189
    %v342 = vpop.f32.mrf.mxu0
    %v343 = vadd.f32 0.0, %v342
    %v344 = vpop.f32.mrf.mxu0
    %v345 = vadd.f32 0.0, %v344
    %346 = vmatmul.bf16.gmra.mxu0 %v192
    %v347 = vpop.f32.mrf.mxu0
    %v348 = vadd.f32 0.0, %v347
    %v349 = vpop.f32.mrf.mxu0
    %v350 = vadd.f32 0.0, %v349
    %351 = vmatmul.bf16.gmra.mxu0 %v195
    %v352 = vpop.f32.mrf.mxu0
    %v353 = vadd.f32 0.0, %v352
    %v354 = vpop.f32.mrf.mxu0
    %v355 = vadd.f32 0.0, %v354
    %356 = vmatmul.bf16.gmra.mxu0 %v198
    %v357 = vpop.f32.mrf.mxu0
    %v358 = vadd.f32 0.0, %v357
    %v359 = vpop.f32.mrf.mxu0
    %v360 = vadd.f32 0.0, %v359
    %361 = vmatmul.bf16.gmra.mxu0 %v201
    %v362 = vpop.f32.mrf.mxu0
    %v363 = vadd.f32 0.0, %v362
    %v364 = vpop.f32.mrf.mxu0
    %v365 = vadd.f32 0.0, %v364
    %366 = vmatmul.bf16.gmra.mxu0 %v204
    %v367 = vpop.f32.mrf.mxu0
    %v368 = vadd.f32 0.0, %v367
    %v369 = vpop.f32.mrf.mxu0
    %v370 = vadd.f32 0.0, %v369
    %371 = vmatmul.bf16.gmra.mxu0 %v207
    %v372 = vpop.f32.mrf.mxu0
    %v373 = vadd.f32 0.0, %v372
    %v374 = vpop.f32.mrf.mxu0
    %v375 = vadd.f32 0.0, %v374
    %376 = vmatmul.bf16.gmra.mxu0 %v210
    %v377 = vpop.f32.mrf.mxu0
    %v378 = vadd.f32 0.0, %v377
    %v379 = vpop.f32.mrf.mxu0
    %v380 = vadd.f32 0.0, %v379
    %381 = vmatmul.bf16.gmra.mxu0 %v213
    %v382 = vpop.f32.mrf.mxu0
    %v383 = vadd.f32 0.0, %v382
    %v384 = vpop.f32.mrf.mxu0
    %v385 = vadd.f32 0.0, %v384
    %386 = vmatmul.bf16.gmra.mxu0 %v216
    %v387 = vpop.f32.mrf.mxu0
    %v388 = vadd.f32 0.0, %v387
    %v389 = vpop.f32.mrf.mxu0
    %v390 = vadd.f32 0.0, %v389
    %391 = vmatmul.bf16.gmra.mxu0 %v219
    %v392 = vpop.f32.mrf.mxu0
    %v393 = vadd.f32 0.0, %v392
    %v394 = vpop.f32.mrf.mxu0
    %v395 = vadd.f32 0.0, %v394
    %396 = vmatmul.bf16.gmra.mxu0 %v222
    %v397 = vpop.f32.mrf.mxu0
    %v398 = vadd.f32 0.0, %v397
    %v399 = vpop.f32.mrf.mxu0
    %v400 = vadd.f32 0.0, %v399
    %401 = vdwg.mxu0
    %v402 = vpack.c.bf16 %v234, %v234
    %v403 = vpack.c.bf16 %v236, %v236
    %v404 = vpack.c.bf16 %v239, %v239
    %v405 = vpack.c.bf16 %v241, %v241
    %v406 = vpack.c.bf16 %v244, %v244
    %v407 = vpack.c.bf16 %v246, %v246
    %v408 = vpack.c.bf16 %v249, %v249
    %v409 = vpack.c.bf16 %v251, %v251
    %v410 = vpack.c.bf16 %v254, %v254
    %v411 = vpack.c.bf16 %v256, %v256
    %v412 = vpack.c.bf16 %v259, %v259
    %v413 = vpack.c.bf16 %v261, %v261
    %v414 = vpack.c.bf16 %v264, %v264
    %v415 = vpack.c.bf16 %v266, %v266
    %v416 = vpack.c.bf16 %v269, %v269
    %v417 = vpack.c.bf16 %v271, %v271
    %v418 = vpack.c.bf16 %v274, %v274
    %v419 = vpack.c.bf16 %v276, %v276
    %v420 = vpack.c.bf16 %v279, %v279
    %v421 = vpack.c.bf16 %v281, %v281
    %v422 = vpack.c.bf16 %v284, %v284
    %v423 = vpack.c.bf16 %v286, %v286
    %v424 = vpack.c.bf16 %v289, %v289
    %v425 = vpack.c.bf16 %v291, %v291
    %v426 = vpack.c.bf16 %v294, %v294
    %v427 = vpack.c.bf16 %v296, %v296
    %v428 = vpack.c.bf16 %v299, %v299
    %v429 = vpack.c.bf16 %v301, %v301
    %v430 = vpack.c.bf16 %v304, %v304
    %v431 = vpack.c.bf16 %v306, %v306
    %v432 = vpack.c.bf16 %v309, %v309
    %v433 = vpack.c.bf16 %v311, %v311
    %vm434 = vcmask 519168
    %435 = vst.msk [vmem:[%s2] sm:$0xf] %vm434, %v402
    %436 = vst.msk [vmem:[%s2 + $0x4] sm:$0xf] %vm434, %v403
    %437 = vst.msk [vmem:[%s2 + $0x8] sm:$0xf] %vm434, %v404
    %438 = vst.msk [vmem:[%s2 + $0xc] sm:$0xf] %vm434, %v405
    %439 = vst.msk [vmem:[%s2 + $0x10] sm:$0xf] %vm434, %v406
    %440 = vst.msk [vmem:[%s2 + $0x14] sm:$0xf] %vm434, %v407
    %441 = vst.msk [vmem:[%s2 + $0x18] sm:$0xf] %vm434, %v408
    %442 = vst.msk [vmem:[%s2 + $0x1c] sm:$0xf] %vm434, %v409
    %443 = vst.msk [vmem:[%s2 + $0x20] sm:$0xf] %vm434, %v410
    %444 = vst.msk [vmem:[%s2 + $0x24] sm:$0xf] %vm434, %v411
    %445 = vst.msk [vmem:[%s2 + $0x28] sm:$0xf] %vm434, %v412
    %446 = vst.msk [vmem:[%s2 + $0x2c] sm:$0xf] %vm434, %v413
    %447 = vst.msk [vmem:[%s2 + $0x30] sm:$0xf] %vm434, %v414
    %448 = vst.msk [vmem:[%s2 + $0x34] sm:$0xf] %vm434, %v415
    %449 = vst.msk [vmem:[%s2 + $0x38] sm:$0xf] %vm434, %v416
    %450 = vst.msk [vmem:[%s2 + $0x3c] sm:$0xf] %vm434, %v417
    %451 = vst.msk [vmem:[%s2 + $0x40] sm:$0xf] %vm434, %v418
    %452 = vst.msk [vmem:[%s2 + $0x44] sm:$0xf] %vm434, %v419
    %453 = vst.msk [vmem:[%s2 + $0x48] sm:$0xf] %vm434, %v420
    %454 = vst.msk [vmem:[%s2 + $0x4c] sm:$0xf] %vm434, %v421
    %455 = vst.msk [vmem:[%s2 + $0x50] sm:$0xf] %vm434, %v422
    %456 = vst.msk [vmem:[%s2 + $0x54] sm:$0xf] %vm434, %v423
    %457 = vst.msk [vmem:[%s2 + $0x58] sm:$0xf] %vm434, %v424
    %458 = vst.msk [vmem:[%s2 + $0x5c] sm:$0xf] %vm434, %v425
    %459 = vst.msk [vmem:[%s2 + $0x60] sm:$0xf] %vm434, %v426
    %460 = vst.msk [vmem:[%s2 + $0x64] sm:$0xf] %vm434, %v427
    %461 = vst.msk [vmem:[%s2 + $0x68] sm:$0xf] %vm434, %v428
    %462 = vst.msk [vmem:[%s2 + $0x6c] sm:$0xf] %vm434, %v429
    %463 = vst.msk [vmem:[%s2 + $0x70] sm:$0xf] %vm434, %v430
    %464 = vst.msk [vmem:[%s2 + $0x74] sm:$0xf] %vm434, %v431
    %465 = vst.msk [vmem:[%s2 + $0x78] sm:$0xf] %vm434, %v432
    %466 = vst.msk [vmem:[%s2 + $0x7c] sm:$0xf] %vm434, %v433
    %v467 = vpack.c.bf16 %v323, %v234
    %v468 = vpack.c.bf16 %v325, %v236
    %v469 = vpack.c.bf16 %v328, %v239
    %v470 = vpack.c.bf16 %v330, %v241
    %v471 = vpack.c.bf16 %v333, %v244
    %v472 = vpack.c.bf16 %v335, %v246
    %v473 = vpack.c.bf16 %v338, %v249
    %v474 = vpack.c.bf16 %v340, %v251
    %v475 = vpack.c.bf16 %v343, %v254
    %v476 = vpack.c.bf16 %v345, %v256
    %v477 = vpack.c.bf16 %v348, %v259
    %v478 = vpack.c.bf16 %v350, %v261
    %v479 = vpack.c.bf16 %v353, %v264
    %v480 = vpack.c.bf16 %v355, %v266
    %v481 = vpack.c.bf16 %v358, %v269
    %v482 = vpack.c.bf16 %v360, %v271
    %v483 = vpack.c.bf16 %v363, %v274
    %v484 = vpack.c.bf16 %v365, %v276
    %v485 = vpack.c.bf16 %v368, %v279
    %v486 = vpack.c.bf16 %v370, %v281
    %v487 = vpack.c.bf16 %v373, %v284
    %v488 = vpack.c.bf16 %v375, %v286
    %v489 = vpack.c.bf16 %v378, %v289
    %v490 = vpack.c.bf16 %v380, %v291
    %v491 = vpack.c.bf16 %v383, %v294
    %v492 = vpack.c.bf16 %v385, %v296
    %v493 = vpack.c.bf16 %v388, %v299
    %v494 = vpack.c.bf16 %v390, %v301
    %v495 = vpack.c.bf16 %v393, %v304
    %v496 = vpack.c.bf16 %v395, %v306
    %v497 = vpack.c.bf16 %v398, %v309
    %v498 = vpack.c.bf16 %v400, %v311
    %531 = vrot.lane.b32.xlu0 %v467, 64
    %v532 = vpop.permute.xlu0 %531
    %533 = vrot.lane.b32.xlu0 %v468, 64
    %v534 = vpop.permute.xlu0 %533
    %535 = vrot.lane.b32.xlu0 %v469, 64
    %v536 = vpop.permute.xlu0 %535
    %537 = vrot.lane.b32.xlu0 %v470, 64
    %v538 = vpop.permute.xlu0 %537
    %539 = vrot.lane.b32.xlu0 %v471, 64
    %v540 = vpop.permute.xlu0 %539
    %541 = vrot.lane.b32.xlu0 %v472, 64
    %v542 = vpop.permute.xlu0 %541
    %543 = vrot.lane.b32.xlu0 %v473, 64
    %v544 = vpop.permute.xlu0 %543
    %545 = vrot.lane.b32.xlu0 %v474, 64
    %v546 = vpop.permute.xlu0 %545
    %547 = vrot.lane.b32.xlu0 %v475, 64
    %v548 = vpop.permute.xlu0 %547
    %549 = vrot.lane.b32.xlu0 %v476, 64
    %v550 = vpop.permute.xlu0 %549
    %551 = vrot.lane.b32.xlu0 %v477, 64
    %v552 = vpop.permute.xlu0 %551
    %553 = vrot.lane.b32.xlu0 %v478, 64
    %v554 = vpop.permute.xlu0 %553
    %555 = vrot.lane.b32.xlu0 %v479, 64
    %v556 = vpop.permute.xlu0 %555
    %557 = vrot.lane.b32.xlu0 %v480, 64
    %v558 = vpop.permute.xlu0 %557
    %559 = vrot.lane.b32.xlu0 %v481, 64
    %v560 = vpop.permute.xlu0 %559
    %561 = vrot.lane.b32.xlu0 %v482, 64
    %v562 = vpop.permute.xlu0 %561
    %563 = vrot.lane.b32.xlu0 %v483, 64
    %v564 = vpop.permute.xlu0 %563
    %565 = vrot.lane.b32.xlu0 %v484, 64
    %v566 = vpop.permute.xlu0 %565
    %567 = vrot.lane.b32.xlu0 %v485, 64
    %v568 = vpop.permute.xlu0 %567
    %569 = vrot.lane.b32.xlu0 %v486, 64
    %v570 = vpop.permute.xlu0 %569
    %571 = vrot.lane.b32.xlu0 %v487, 64
    %v572 = vpop.permute.xlu0 %571
    %573 = vrot.lane.b32.xlu0 %v488, 64
    %v574 = vpop.permute.xlu0 %573
    %575 = vrot.lane.b32.xlu0 %v489, 64
    %v576 = vpop.permute.xlu0 %575
    %577 = vrot.lane.b32.xlu0 %v490, 64
    %v578 = vpop.permute.xlu0 %577
    %579 = vrot.lane.b32.xlu0 %v491, 64
    %v580 = vpop.permute.xlu0 %579
    %581 = vrot.lane.b32.xlu0 %v492, 64
    %v582 = vpop.permute.xlu0 %581
    %583 = vrot.lane.b32.xlu0 %v493, 64
    %v584 = vpop.permute.xlu0 %583
    %585 = vrot.lane.b32.xlu0 %v494, 64
    %v586 = vpop.permute.xlu0 %585
    %587 = vrot.lane.b32.xlu0 %v495, 64
    %v588 = vpop.permute.xlu0 %587
    %589 = vrot.lane.b32.xlu0 %v496, 64
    %v590 = vpop.permute.xlu0 %589
    %591 = vrot.lane.b32.xlu0 %v497, 64
    %v592 = vpop.permute.xlu0 %591
    %593 = vrot.lane.b32.xlu0 %v498, 64
    %v594 = vpop.permute.xlu0 %593
    %v595 = vrot.slane %v532, 4
    %v596 = vrot.slane %v534, 4
    %v597 = vrot.slane %v536, 4
    %v598 = vrot.slane %v538, 4
    %v599 = vrot.slane %v540, 4
    %v600 = vrot.slane %v542, 4
    %v601 = vrot.slane %v544, 4
    %v602 = vrot.slane %v546, 4
    %v603 = vrot.slane %v548, 4
    %v604 = vrot.slane %v550, 4
    %v605 = vrot.slane %v552, 4
    %v606 = vrot.slane %v554, 4
    %v607 = vrot.slane %v556, 4
    %v608 = vrot.slane %v558, 4
    %v609 = vrot.slane %v560, 4
    %v610 = vrot.slane %v562, 4
    %v611 = vrot.slane %v564, 4
    %v612 = vrot.slane %v566, 4
    %v613 = vrot.slane %v568, 4
    %v614 = vrot.slane %v570, 4
    %v615 = vrot.slane %v572, 4
    %v616 = vrot.slane %v574, 4
    %v617 = vrot.slane %v576, 4
    %v618 = vrot.slane %v578, 4
    %v619 = vrot.slane %v580, 4
    %v620 = vrot.slane %v582, 4
    %v621 = vrot.slane %v584, 4
    %v622 = vrot.slane %v586, 4
    %v623 = vrot.slane %v588, 4
    %v624 = vrot.slane %v590, 4
    %v625 = vrot.slane %v592, 4
    %v626 = vrot.slane %v594, 4
    %vm627 = vcmask 523264
    %v628 = vsel %vm627, %v532, %v595
    %v629 = vsel %vm627, %v534, %v596
    %v630 = vsel %vm627, %v536, %v597
    %v631 = vsel %vm627, %v538, %v598
    %v632 = vsel %vm627, %v540, %v599
    %v633 = vsel %vm627, %v542, %v600
    %v634 = vsel %vm627, %v544, %v601
    %v635 = vsel %vm627, %v546, %v602
    %v636 = vsel %vm627, %v548, %v603
    %v637 = vsel %vm627, %v550, %v604
    %v638 = vsel %vm627, %v552, %v605
    %v639 = vsel %vm627, %v554, %v606
    %v640 = vsel %vm627, %v556, %v607
    %v641 = vsel %vm627, %v558, %v608
    %v642 = vsel %vm627, %v560, %v609
    %v643 = vsel %vm627, %v562, %v610
    %v644 = vsel %vm627, %v564, %v611
    %v645 = vsel %vm627, %v566, %v612
    %v646 = vsel %vm627, %v568, %v613
    %v647 = vsel %vm627, %v570, %v614
    %v648 = vsel %vm627, %v572, %v615
    %v649 = vsel %vm627, %v574, %v616
    %v650 = vsel %vm627, %v576, %v617
    %v651 = vsel %vm627, %v578, %v618
    %v652 = vsel %vm627, %v580, %v619
    %v653 = vsel %vm627, %v582, %v620
    %v654 = vsel %vm627, %v584, %v621
    %v655 = vsel %vm627, %v586, %v622
    %v656 = vsel %vm627, %v588, %v623
    %v657 = vsel %vm627, %v590, %v624
    %v658 = vsel %vm627, %v592, %v625
    %v659 = vsel %vm627, %v594, %v626
    %692 = vst [vmem:[#allocation2] sm:$0xf] %v628
    %693 = vst [vmem:[#allocation2 + $0x4] sm:$0xf] %v629
    %694 = vst [vmem:[#allocation2 + $0x8] sm:$0xf] %v630
    %695 = vst [vmem:[#allocation2 + $0xc] sm:$0xf] %v631
    %696 = vst [vmem:[#allocation2 + $0x10] sm:$0xf] %v632
    %697 = vst [vmem:[#allocation2 + $0x14] sm:$0xf] %v633
    %698 = vst [vmem:[#allocation2 + $0x18] sm:$0xf] %v634
    %699 = vst [vmem:[#allocation2 + $0x1c] sm:$0xf] %v635
    %700 = vst [vmem:[#allocation2 + $0x20] sm:$0xf] %v636
    %701 = vst [vmem:[#allocation2 + $0x24] sm:$0xf] %v637
    %702 = vst [vmem:[#allocation2 + $0x28] sm:$0xf] %v638
    %703 = vst [vmem:[#allocation2 + $0x2c] sm:$0xf] %v639
    %704 = vst [vmem:[#allocation2 + $0x30] sm:$0xf] %v640
    %705 = vst [vmem:[#allocation2 + $0x34] sm:$0xf] %v641
    %706 = vst [vmem:[#allocation2 + $0x38] sm:$0xf] %v642
    %707 = vst [vmem:[#allocation2 + $0x3c] sm:$0xf] %v643
    %708 = vst [vmem:[#allocation2 + $0x40] sm:$0xf] %v644
    %709 = vst [vmem:[#allocation2 + $0x44] sm:$0xf] %v645
    %710 = vst [vmem:[#allocation2 + $0x48] sm:$0xf] %v646
    %711 = vst [vmem:[#allocation2 + $0x4c] sm:$0xf] %v647
    %712 = vst [vmem:[#allocation2 + $0x50] sm:$0xf] %v648
    %713 = vst [vmem:[#allocation2 + $0x54] sm:$0xf] %v649
    %714 = vst [vmem:[#allocation2 + $0x58] sm:$0xf] %v650
    %715 = vst [vmem:[#allocation2 + $0x5c] sm:$0xf] %v651
    %716 = vst [vmem:[#allocation2 + $0x60] sm:$0xf] %v652
    %717 = vst [vmem:[#allocation2 + $0x64] sm:$0xf] %v653
    %718 = vst [vmem:[#allocation2 + $0x68] sm:$0xf] %v654
    %719 = vst [vmem:[#allocation2 + $0x6c] sm:$0xf] %v655
    %720 = vst [vmem:[#allocation2 + $0x70] sm:$0xf] %v656
    %721 = vst [vmem:[#allocation2 + $0x74] sm:$0xf] %v657
    %722 = vst [vmem:[#allocation2 + $0x78] sm:$0xf] %v658
    %723 = vst [vmem:[#allocation2 + $0x7c] sm:$0xf] %v659
    // Predicated region
    $region10: #{tpu_custom_call.1} parent=1 // pred_check
      _
    $region11: #{tpu_custom_call.1} parent=1 // pred_check_branch
      %725 = sbr.rel (0) target = $region13
    $region12: #{tpu_custom_call.1} parent=1 // pred_region
      _
    $region13: #{tpu_custom_call.1} parent=1 // pred_fallthru
      _
    // Predicated region
    $region14: #{tpu_custom_call.1} parent=1 // pred_check
      _
    $region15: #{tpu_custom_call.1} parent=1 // pred_check_branch
      %727 = sbr.rel (0) target = $region17
    $region16: #{tpu_custom_call.1} parent=1 // pred_region
      %729 = vsyncadd [#allocation3], 0
      %s730 = sshll.u32 [#allocation2], 4
      %s731 = int_to_ptr.vmem [resolvable:$true] %s730
      %s732 = sshll.u32 %s3, 4
      %s733 = int_to_ptr.hbm [resolvable:$true] %s732
      %738 = dma.vmem_to_hbm [thread:$0]  %s731, 2048, %s733, [#allocation3], 64, 64, 4
    $region17: #{tpu_custom_call.1} parent=1 // pred_fallthru
      _
    // Predicated region
    $region18: #{tpu_custom_call.1} parent=1 // pred_check
      _
    $region19: #{tpu_custom_call.1} parent=1 // pred_check_branch
      %740 = sbr.rel (0) target = $region21
    $region20: #{tpu_custom_call.1} parent=1 // pred_region
      _
    $region21: #{tpu_custom_call.1} parent=1 // pred_fallthru
      _
    // Predicated region
    $region22: #{tpu_custom_call.1} parent=1 // pred_check
      _
    $region23: #{tpu_custom_call.1} parent=1 // pred_check_branch
      %742 = sbr.rel (0) target = $region25
    $region24: #{tpu_custom_call.1} parent=1 // pred_region
      %744 = dma.done [#allocation3], 2048
    $region25: #{tpu_custom_call.1} parent=1 // pred_fallthru
      _
    %745 = vsyncpa [#allocation3], 1

</llo_original>
